<compile_context>
chip_gen: v5e
topology: v5e:2x2
jax: 0.10.0
libtpu: 0.0.40
codegen_flags: <defaults>
</compile_context>

<pallas_src>
import functools

import jax
import jax.numpy as jnp
from jax.experimental import pallas as pl
from jax.experimental.pallas import tpu as pltpu

D_IN = 28 * 28    # 784
D_H = 128
D_OUT = 10
OUT_PAD = 128     # lane-dense padded output width (multiple of 128)
TM_MAX = 1024     # default max batch tile; VMEM footprint ~7 MiB (fits v7x's 64 MiB)


def _round_up(x, m):
    return (x + m - 1) // m * m


def mlp_kernel(x_ref, w1_ref, b1_ref, w2_ref, b2_ref, o_ref):
    # In-kernel f32->bf16 cast of the activation stream (VPU has huge slack in
    # this mem-bound body; avoids a separate HBM cast pass in the wrapper).
    x = x_ref[...].astype(jnp.bfloat16)
    # fc1: [TM,784]bf16 @ [784,128]bf16 -> f32 accumulate on the MXU.
    h = jnp.dot(x, w1_ref[...], preferred_element_type=jnp.float32)
    h = jnp.maximum(h + b1_ref[...], 0.0)                  # bias + ReLU in f32
    # fc2: [TM,128]bf16 @ [128,128(pad)]bf16 -> f32 accumulate.
    out = jnp.dot(h.astype(jnp.bfloat16), w2_ref[...],
                  preferred_element_type=jnp.float32)
    o_ref[...] = (out + b2_ref[...]).astype(o_ref.dtype)   # bf16 lane-dense store


def prepare_params(w1, b1, w2, b2):
    """One-time weight prep, hoisted out of the forward path.

    Expects [in, out] layout: w1 [784,128], b1 [1,128] (or [128]),
    w2 [128,10], b2 [1,10] (or [10]).  NOTE: torch.nn.Linear state_dicts store
    weights as [out, in]; transpose before calling this.
    """
    w1_bf = jnp.asarray(w1, jnp.bfloat16)
    b1_f = jnp.asarray(b1, jnp.float32).reshape(1, D_H)
    w2_bf = jnp.zeros((D_H, OUT_PAD), jnp.bfloat16).at[:, :D_OUT].set(
        jnp.asarray(w2, jnp.bfloat16))
    b2_p = jnp.zeros((1, OUT_PAD), jnp.float32).at[:, :D_OUT].set(
        jnp.asarray(b2, jnp.float32).reshape(1, D_OUT))
    return w1_bf, b1_f, w2_bf, b2_p


def _pick_tiling(B, tm_max):
    """(TM, B_pad): TM a multiple of 8, tail padding kept small, and >=2 grid
    steps whenever the batch allows (so v7x's 2nd TensorCore gets work)."""
    B8 = _round_up(B, 8)
    n_steps = max(1, pl.cdiv(B8, tm_max))
    if n_steps == 1 and B8 >= 16:
        n_steps = 2
    TM = _round_up(pl.cdiv(B8, n_steps), 8)
    return TM, n_steps * TM


@functools.partial(jax.jit, static_argnames=("tm",))
def simple_nn_forward(x, w1_bf, b1_f, w2_bf, b2_p, *, tm=TM_MAX):
    """x: [B, 784] f32; remaining args from prepare_params().
    Returns [B, 10] f32 — same semantics as TorchSimpleNN.forward."""
    B = x.shape[0]
    TM, B_pad = _pick_tiling(B, tm)

    x_in = jnp.asarray(x, jnp.float32)
    if B_pad != B:
        x_in = jnp.pad(x_in, ((0, B_pad - B), (0, 0)))   # tiny tail pad, fused in jit
    grid = (B_pad // TM,)

    # Right-sized VMEM limit: double-buffered activation/output stream +
    # resident weights, with 2x headroom for compiler scratch.
    block_bytes = (
        2 * TM * D_IN * 4                          # x blocks (f32, double-buffered)
        + 2 * TM * OUT_PAD * 2                     # out blocks (bf16, double-buffered)
        + 2 * (D_IN * D_H * 2 + D_H * 4            # w1 + b1
               + D_H * OUT_PAD * 2 + OUT_PAD * 4)  # w2 + b2 (padded)
    )
    vmem_limit = min(max(4 * 1024 * 1024, 2 * block_bytes), 48 * 1024 * 1024)

    out_padded = pl.pallas_call(
        mlp_kernel,
        out_shape=jax.ShapeDtypeStruct((B_pad, OUT_PAD), jnp.bfloat16),
        grid=grid,
        in_specs=[
            pl.BlockSpec((TM, D_IN), lambda i: (i, 0)),       # activation stream
            pl.BlockSpec((D_IN, D_H), lambda i: (0, 0)),      # w1 resident
            pl.BlockSpec((1, D_H), lambda i: (0, 0)),         # b1 resident
            pl.BlockSpec((D_H, OUT_PAD), lambda i: (0, 0)),   # w2 resident (padded)
            pl.BlockSpec((1, OUT_PAD), lambda i: (0, 0)),     # b2 resident (padded)
        ],
        out_specs=pl.BlockSpec((TM, OUT_PAD), lambda i: (i, 0)),
        compiler_params=pltpu.CompilerParams(
            dimension_semantics=("parallel",),   # megacore / v7x 2nd TC sharding
            vmem_limit_bytes=vmem_limit,
        ),
    )(x_in, w1_bf, b1_f, w2_bf, b2_p)

    # Fused in the jit: drop padded rows/lanes (padded rows hold garbage) and
    # upcast the bf16 store back to f32.
    return out_padded[:B, :D_OUT].astype(jnp.float32)


def init_params(key):
    """torch.nn.Linear-style init; weights stored [in, out] for the kernel."""
    k1, k2, k3, k4 = jax.random.split(key, 4)
    bound1 = 1.0 / jnp.sqrt(784.0)
    bound2 = 1.0 / jnp.sqrt(128.0)
    w1 = jax.random.uniform(k1, (D_IN, D_H), jnp.float32, -bound1, bound1)
    b1 = jax.random.uniform(k2, (1, D_H), jnp.float32, -bound1, bound1)
    w2 = jax.random.uniform(k3, (D_H, D_OUT), jnp.float32, -bound2, bound2)
    b2 = jax.random.uniform(k4, (1, D_OUT), jnp.float32, -bound2, bound2)
    return w1, b1, w2, b2


def _reference(x, w1, b1, w2, b2):
    return jnp.maximum(x @ w1 + b1, 0.0) @ w2 + b2


if __name__ == "__main__":
    key = jax.random.PRNGKey(0)
    kx1, kx2, kp = jax.random.split(key, 3)
    w1, b1, w2, b2 = init_params(kp)
    params = prepare_params(w1, b1, w2, b2)   # hoisted: done once, reused

    # Small batch (single grid step path).
    B1 = 8
    x1 = jax.random.normal(kx1, (B1, D_IN), jnp.float32)
    out1 = jax.block_until_ready(simple_nn_forward(x1, *params))
    ref1 = _reference(x1, w1, b1, w2, b2)
    assert out1.shape == (B1, D_OUT)
    assert out1.dtype == jnp.float32
    assert jnp.allclose(out1, ref1, atol=2e-2, rtol=2e-2), \
        float(jnp.max(jnp.abs(out1 - ref1)))

    # Non-multiple-of-8 batch: exercises >=2 grid steps + small tail padding.
    B2 = 37
    x2 = jax.random.normal(kx2, (B2, D_IN), jnp.float32)
    out2 = jax.block_until_ready(simple_nn_forward(x2, *params))
    ref2 = _reference(x2, w1, b1, w2, b2)
    assert out2.shape == (B2, D_OUT)
    assert jnp.allclose(out2, ref2, atol=2e-2, rtol=2e-2), \
        float(jnp.max(jnp.abs(out2 - ref2)))

    print("KERNEL_OK")
</pallas_src>

<mosaic_0001>
module attributes {stable_mosaic.version = 11 : i64} {
  func.func @mlp_kernel(%arg0: i32, %arg1: memref<8x784xf32, #tpu.memory_space<vmem>>, %arg2: memref<784x128xbf16, #tpu.memory_space<vmem>>, %arg3: memref<1x128xf32, #tpu.memory_space<vmem>>, %arg4: memref<128x128xbf16, #tpu.memory_space<vmem>>, %arg5: memref<1x128xf32, #tpu.memory_space<vmem>>, %arg6: memref<8x128xbf16, #tpu.memory_space<vmem>>) attributes {dimension_semantics = [#tpu.dimension_semantics<parallel>], iteration_bounds = array<i64: 1>, scalar_prefetch = 0 : i64, scratch_operands = 0 : i64, tpu.core_type = #tpu.core_type<tc>, window_params = [{transform_indices = @transform_0, window_bounds = array<i64: 8, 784>}, {pipeline_mode = #tpu.pipeline_mode<synchronous>, transform_indices = @transform_1, window_bounds = array<i64: 784, 128>}, {pipeline_mode = #tpu.pipeline_mode<synchronous>, transform_indices = @transform_2, window_bounds = array<i64: 1, 128>}, {pipeline_mode = #tpu.pipeline_mode<synchronous>, transform_indices = @transform_3, window_bounds = array<i64: 128, 128>}, {pipeline_mode = #tpu.pipeline_mode<synchronous>, transform_indices = @transform_4, window_bounds = array<i64: 1, 128>}, {transform_indices = @transform_5, window_bounds = array<i64: 8, 128>}]} {
    %c0 = arith.constant 0 : index
    %c0_0 = arith.constant 0 : index
    %0 = vector.load %arg1[%c0, %c0_0] : memref<8x784xf32, #tpu.memory_space<vmem>>, vector<8x784xf32>
    %1 = arith.truncf %0 : vector<8x784xf32> to vector<8x784xbf16>
    %c0_1 = arith.constant 0 : index
    %c0_2 = arith.constant 0 : index
    %2 = vector.load %arg2[%c0_1, %c0_2] : memref<784x128xbf16, #tpu.memory_space<vmem>>, vector<784x128xbf16>
    %cst = arith.constant dense<0.000000e+00> : vector<8x128xf32>
    %3 = tpu.matmul %1, %2, %cst {dimension_numbers = #tpu.dot_dimension_numbers<[1], [0], [0], [1], [0, 0, 1, 1], [], []>} : vector<8x784xbf16>, vector<784x128xbf16>, vector<8x128xf32> -> vector<8x128xf32>
    %c0_3 = arith.constant 0 : index
    %c0_4 = arith.constant 0 : index
    %4 = vector.load %arg3[%c0_3, %c0_4] : memref<1x128xf32, #tpu.memory_space<vmem>>, vector<1x128xf32>
    %5 = vector.broadcast %4 : vector<1x128xf32> to vector<8x128xf32>
    %6 = arith.addf %3, %5 : vector<8x128xf32>
    %cst_5 = arith.constant 0.000000e+00 : f32
    %7 = vector.broadcast %cst_5 : f32 to vector<8x128xf32>
    %8 = arith.maximumf %6, %7 : vector<8x128xf32>
    %9 = arith.truncf %8 : vector<8x128xf32> to vector<8x128xbf16>
    %c0_6 = arith.constant 0 : index
    %c0_7 = arith.constant 0 : index
    %10 = vector.load %arg4[%c0_6, %c0_7] : memref<128x128xbf16, #tpu.memory_space<vmem>>, vector<128x128xbf16>
    %cst_8 = arith.constant dense<0.000000e+00> : vector<8x128xf32>
    %11 = tpu.matmul %9, %10, %cst_8 {dimension_numbers = #tpu.dot_dimension_numbers<[1], [0], [0], [1], [0, 0, 1, 1], [], []>} : vector<8x128xbf16>, vector<128x128xbf16>, vector<8x128xf32> -> vector<8x128xf32>
    %c0_9 = arith.constant 0 : index
    %c0_10 = arith.constant 0 : index
    %12 = vector.load %arg5[%c0_9, %c0_10] : memref<1x128xf32, #tpu.memory_space<vmem>>, vector<1x128xf32>
    %13 = vector.broadcast %12 : vector<1x128xf32> to vector<8x128xf32>
    %14 = arith.addf %11, %13 : vector<8x128xf32>
    %15 = arith.truncf %14 : vector<8x128xf32> to vector<8x128xbf16>
    %c0_11 = arith.constant 0 : index
    %c0_12 = arith.constant 0 : index
    %16 = vector.load %arg6[%c0_11, %c0_12] : memref<8x128xbf16, #tpu.memory_space<vmem>>, vector<8x128xbf16>
    tpu.vector_store %arg6[%c0_11, %c0_12], %15 {strides = array<i32>} : memref<8x128xbf16, #tpu.memory_space<vmem>>, vector<8x128xbf16>,
    return
  }
  func.func @transform_0(%arg0: i32) -> (i32, i32) {
    %c0_i32 = arith.constant 0 : i32
    %c0_i32_0 = arith.constant 0 : i32
    return %arg0, %c0_i32 : i32, i32
  }
  func.func @transform_1(%arg0: i32) -> (i32, i32) {
    %c0_i32 = arith.constant 0 : i32
    %c0_i32_0 = arith.constant 0 : i32
    %c0_i32_1 = arith.constant 0 : i32
    return %c0_i32, %c0_i32_0 : i32, i32
  }
  func.func @transform_2(%arg0: i32) -> (i32, i32) {
    %c0_i32 = arith.constant 0 : i32
    %c0_i32_0 = arith.constant 0 : i32
    %c0_i32_1 = arith.constant 0 : i32
    return %c0_i32, %c0_i32_0 : i32, i32
  }
  func.func @transform_3(%arg0: i32) -> (i32, i32) {
    %c0_i32 = arith.constant 0 : i32
    %c0_i32_0 = arith.constant 0 : i32
    %c0_i32_1 = arith.constant 0 : i32
    return %c0_i32, %c0_i32_0 : i32, i32
  }
  func.func @transform_4(%arg0: i32) -> (i32, i32) {
    %c0_i32 = arith.constant 0 : i32
    %c0_i32_0 = arith.constant 0 : i32
    %c0_i32_1 = arith.constant 0 : i32
    return %c0_i32, %c0_i32_0 : i32, i32
  }
  func.func @transform_5(%arg0: i32) -> (i32, i32) {
    %c0_i32 = arith.constant 0 : i32
    %c0_i32_0 = arith.constant 0 : i32
    return %arg0, %c0_i32 : i32, i32
  }
}

</mosaic_0001>

<llo_original>
// kernel: simple_nn_forward.1
$region0: #{simple_nn_forward.1}
  #allocation0 [shape = 'u32[]', space=smem, size = 0x4, offset = 0x4, fixed_abs, tag = 'smem constant byte address 0x4 - core index']
  #allocation1 [shape = 'u32[72,128]{1,0:T(1,128)}', space=vmem, size = 0x9000, scoped, tag = 'internal scratch']
  %s0 = inlined_call_operand.hbm [shape: f32[8,784], index: 0, kind: input, shape index: {}]
  %s1 = inlined_call_operand.hbm [shape: bf16[784,128], index: 1, kind: input, shape index: {}]
  %s2 = inlined_call_operand.vmem [shape: f32[1,128], index: 2, kind: input, shape index: {}]
  %s3 = inlined_call_operand.hbm [shape: bf16[128,128], index: 3, kind: input, shape index: {}]
  %s4 = inlined_call_operand.vmem [shape: f32[1,128], index: 4, kind: input, shape index: {}]
  %s5 = inlined_call_operand.vmem [shape: bf16[8,128], index: 5, kind: output, shape index: {}]
  %s6 = sld [smem:[#allocation0]]
  $region42: #{simple_nn_forward.1} parent=0
    _
  %s8 = ssub.s32 1, %s6
  %s9 = scalar_select 0, %s8, %s6
  $region1: #{simple_nn_forward.1} parent=0
    #allocation2 [shape = 'u8[28672]{0}', space=vmem, size = 0x7000, scoped, tag = 'input window, operand 0, single buffered']
    #allocation3 [shape = 's32[1]{0}', space=sflag, size = 0x4, scoped, tag = 'scoped memory for simple_nn_forward.1']
    #allocation4 [shape = 'u8[200704]{0}', space=vmem, size = 0x31000, scoped, tag = 'input window, operand 1, single buffered']
    #allocation5 [shape = 's32[1]{0}', space=sflag, size = 0x4, scoped, tag = 'scoped memory for simple_nn_forward.1']
    #allocation6 [shape = 'u8[32768]{0}', space=vmem, size = 0x8000, scoped, tag = 'input window, operand 3, single buffered']
    %10 = vsyncpa [#allocation3], 0
    %11 = vsyncpa [#allocation5], 0
    // Predicated region
    $region2: #{simple_nn_forward.1} parent=1 // pred_check
      _
    $region3: #{simple_nn_forward.1} parent=1 // pred_check_branch
      %13 = sbr.rel (0) target = $region5
    $region4: #{simple_nn_forward.1} parent=1 // pred_region
      %15 = vsyncadd [#allocation3], 0
      %s17 = sshll.u32 %s0, 4
      %s18 = int_to_ptr.hbm [resolvable:$true] %s17
      %s19 = sshll.u32 [#allocation2], 4
      %s20 = int_to_ptr.vmem [resolvable:$true] %s19
      %22 = dma.hbm_to_vmem [thread:$0]  %s18, 896, %s20, [#allocation3]
    $region5: #{simple_nn_forward.1} parent=1 // pred_fallthru
      _
    // Predicated region
    $region6: #{simple_nn_forward.1} parent=1 // pred_check
      _
    $region7: #{simple_nn_forward.1} parent=1 // pred_check_branch
      %24 = sbr.rel (0) target = $region9
    $region8: #{simple_nn_forward.1} parent=1 // pred_region
      %26 = vsyncadd [#allocation5], 0
      %s27 = sshll.u32 %s1, 4
      %s28 = int_to_ptr.hbm [resolvable:$true] %s27
      %s29 = sshll.u32 [#allocation4], 4
      %s30 = int_to_ptr.vmem [resolvable:$true] %s29
      %35 = dma.hbm_to_vmem [thread:$0]  %s28, 6272, %s30, [#allocation5], 64, 64, 4
    $region9: #{simple_nn_forward.1} parent=1 // pred_fallthru
      _
    // Predicated region
    $region10: #{simple_nn_forward.1} parent=1 // pred_check
      _
    $region11: #{simple_nn_forward.1} parent=1 // pred_check_branch
      %37 = sbr.rel (0) target = $region13
    $region12: #{simple_nn_forward.1} parent=1 // pred_region
      _
    $region13: #{simple_nn_forward.1} parent=1 // pred_fallthru
      _
    // Predicated region
    $region14: #{simple_nn_forward.1} parent=1 // pred_check
      _
    $region15: #{simple_nn_forward.1} parent=1 // pred_check_branch
      %39 = sbr.rel (0) target = $region17
    $region16: #{simple_nn_forward.1} parent=1 // pred_region
      %41 = vsyncadd [#allocation5], 0
      %s42 = sshll.u32 %s3, 4
      %s43 = int_to_ptr.hbm [resolvable:$true] %s42
      %s44 = sshll.u32 [#allocation6], 4
      %s45 = int_to_ptr.vmem [resolvable:$true] %s44
      %50 = dma.hbm_to_vmem [thread:$0]  %s43, 1024, %s45, [#allocation5], 64, 64, 4
    $region17: #{simple_nn_forward.1} parent=1 // pred_fallthru
      _
    // Predicated region
    $region18: #{simple_nn_forward.1} parent=1 // pred_check
      _
    $region19: #{simple_nn_forward.1} parent=1 // pred_check_branch
      %52 = sbr.rel (0) target = $region21
    $region20: #{simple_nn_forward.1} parent=1 // pred_region
      _
    $region21: #{simple_nn_forward.1} parent=1 // pred_fallthru
      _
    // Predicated region
    $region22: #{simple_nn_forward.1} parent=1 // pred_check
      _
    $region23: #{simple_nn_forward.1} parent=1 // pred_check_branch
      %54 = sbr.rel (0) target = $region25
    $region24: #{simple_nn_forward.1} parent=1 // pred_region
      %56 = dma.done [#allocation3], 896
    $region25: #{simple_nn_forward.1} parent=1 // pred_fallthru
      _
    // Predicated region
    $region26: #{simple_nn_forward.1} parent=1 // pred_check
      _
    $region27: #{simple_nn_forward.1} parent=1 // pred_check_branch
      %58 = sbr.rel (0) target = $region29
    $region28: #{simple_nn_forward.1} parent=1 // pred_region
      %60 = dma.done [#allocation5], 6272
    $region29: #{simple_nn_forward.1} parent=1 // pred_fallthru
      _
    // Predicated region
    $region30: #{simple_nn_forward.1} parent=1 // pred_check
      _
    $region31: #{simple_nn_forward.1} parent=1 // pred_check_branch
      %62 = sbr.rel (0) target = $region33
    $region32: #{simple_nn_forward.1} parent=1 // pred_region
      %64 = dma.done [#allocation5], 1024
    $region33: #{simple_nn_forward.1} parent=1 // pred_fallthru
      _
    %v66 = vld [vmem:[#allocation2] sm:$0xff]
    %v67 = vld [vmem:[#allocation2 + $0x8] sm:$0xff]
    %v68 = vld [vmem:[#allocation2 + $0x10] sm:$0xff]
    %v69 = vld [vmem:[#allocation2 + $0x18] sm:$0xff]
    %v70 = vld [vmem:[#allocation2 + $0x20] sm:$0xff]
    %v71 = vld [vmem:[#allocation2 + $0x28] sm:$0xff]
    %v72 = vld [vmem:[#allocation2 + $0x30] sm:$0xff]
    %v73 = vpack.c.bf16 %v66, %v66
    %v74 = vpack.c.bf16 %v67, %v67
    %v75 = vpack.c.bf16 %v68, %v68
    %v76 = vpack.c.bf16 %v69, %v69
    %v77 = vpack.c.bf16 %v70, %v70
    %v78 = vpack.c.bf16 %v71, %v71
    %v79 = vpack.c.bf16 %v72, %v72
    %v80 = vld [vmem:[#allocation4] sm:$0xf]
    %v81 = vld [vmem:[#allocation4 + $0x4] sm:$0xf]
    %v82 = vld [vmem:[#allocation4 + $0x8] sm:$0xf]
    %v83 = vld [vmem:[#allocation4 + $0xc] sm:$0xf]
    %v84 = vld [vmem:[#allocation4 + $0x10] sm:$0xf]
    %v85 = vld [vmem:[#allocation4 + $0x14] sm:$0xf]
    %v86 = vld [vmem:[#allocation4 + $0x18] sm:$0xf]
    %v87 = vld [vmem:[#allocation4 + $0x1c] sm:$0xf]
    %v88 = vld [vmem:[#allocation4 + $0x20] sm:$0xf]
    %v89 = vld [vmem:[#allocation4 + $0x24] sm:$0xf]
    %v90 = vld [vmem:[#allocation4 + $0x28] sm:$0xf]
    %v91 = vld [vmem:[#allocation4 + $0x2c] sm:$0xf]
    %v92 = vld [vmem:[#allocation4 + $0x30] sm:$0xf]
    %v93 = vld [vmem:[#allocation4 + $0x34] sm:$0xf]
    %v94 = vld [vmem:[#allocation4 + $0x38] sm:$0xf]
    %v95 = vld [vmem:[#allocation4 + $0x3c] sm:$0xf]
    %v96 = vld [vmem:[#allocation4 + $0x40] sm:$0xf]
    %v97 = vld [vmem:[#allocation4 + $0x44] sm:$0xf]
    %v98 = vld [vmem:[#allocation4 + $0x48] sm:$0xf]
    %v99 = vld [vmem:[#allocation4 + $0x4c] sm:$0xf]
    %v100 = vld [vmem:[#allocation4 + $0x50] sm:$0xf]
    %v101 = vld [vmem:[#allocation4 + $0x54] sm:$0xf]
    %v102 = vld [vmem:[#allocation4 + $0x58] sm:$0xf]
    %v103 = vld [vmem:[#allocation4 + $0x5c] sm:$0xf]
    %v104 = vld [vmem:[#allocation4 + $0x60] sm:$0xf]
    %v105 = vld [vmem:[#allocation4 + $0x64] sm:$0xf]
    %v106 = vld [vmem:[#allocation4 + $0x68] sm:$0xf]
    %v107 = vld [vmem:[#allocation4 + $0x6c] sm:$0xf]
    %v108 = vld [vmem:[#allocation4 + $0x70] sm:$0xf]
    %v109 = vld [vmem:[#allocation4 + $0x74] sm:$0xf]
    %v110 = vld [vmem:[#allocation4 + $0x78] sm:$0xf]
    %v111 = vld [vmem:[#allocation4 + $0x7c] sm:$0xf]
    %v112 = vld [vmem:[#allocation4 + $0x80] sm:$0xf]
    %v113 = vld [vmem:[#allocation4 + $0x84] sm:$0xf]
    %v114 = vld [vmem:[#allocation4 + $0x88] sm:$0xf]
    %v115 = vld [vmem:[#allocation4 + $0x8c] sm:$0xf]
    %v116 = vld [vmem:[#allocation4 + $0x90] sm:$0xf]
    %v117 = vld [vmem:[#allocation4 + $0x94] sm:$0xf]
    %v118 = vld [vmem:[#allocation4 + $0x98] sm:$0xf]
    %v119 = vld [vmem:[#allocation4 + $0x9c] sm:$0xf]
    %v120 = vld [vmem:[#allocation4 + $0xa0] sm:$0xf]
    %v121 = vld [vmem:[#allocation4 + $0xa4] sm:$0xf]
    %v122 = vld [vmem:[#allocation4 + $0xa8] sm:$0xf]
    %v123 = vld [vmem:[#allocation4 + $0xac] sm:$0xf]
    %v124 = vld [vmem:[#allocation4 + $0xb0] sm:$0xf]
    %v125 = vld [vmem:[#allocation4 + $0xb4] sm:$0xf]
    %v126 = vld [vmem:[#allocation4 + $0xb8] sm:$0xf]
    %v127 = vld [vmem:[#allocation4 + $0xbc] sm:$0xf]
    %v128 = vld [vmem:[#allocation4 + $0xc0] sm:$0xf]
    %v129 = vld [vmem:[#allocation4 + $0xc4] sm:$0xf]
    %v130 = vld [vmem:[#allocation4 + $0xc8] sm:$0xf]
    %v131 = vld [vmem:[#allocation4 + $0xcc] sm:$0xf]
    %v132 = vld [vmem:[#allocation4 + $0xd0] sm:$0xf]
    %v133 = vld [vmem:[#allocation4 + $0xd4] sm:$0xf]
    %v134 = vld [vmem:[#allocation4 + $0xd8] sm:$0xf]
    %v135 = vld [vmem:[#allocation4 + $0xdc] sm:$0xf]
    %v136 = vld [vmem:[#allocation4 + $0xe0] sm:$0xf]
    %v137 = vld [vmem:[#allocation4 + $0xe4] sm:$0xf]
    %v138 = vld [vmem:[#allocation4 + $0xe8] sm:$0xf]
    %v139 = vld [vmem:[#allocation4 + $0xec] sm:$0xf]
    %v140 = vld [vmem:[#allocation4 + $0xf0] sm:$0xf]
    %v141 = vld [vmem:[#allocation4 + $0xf4] sm:$0xf]
    %v142 = vld [vmem:[#allocation4 + $0xf8] sm:$0xf]
    %v143 = vld [vmem:[#allocation4 + $0xfc] sm:$0xf]
    %v144 = vld [vmem:[#allocation4 + $0x100] sm:$0xf]
    %v145 = vld [vmem:[#allocation4 + $0x104] sm:$0xf]
    %v146 = vld [vmem:[#allocation4 + $0x108] sm:$0xf]
    %v147 = vld [vmem:[#allocation4 + $0x10c] sm:$0xf]
    %v148 = vld [vmem:[#allocation4 + $0x110] sm:$0xf]
    %v149 = vld [vmem:[#allocation4 + $0x114] sm:$0xf]
    %v150 = vld [vmem:[#allocation4 + $0x118] sm:$0xf]
    %v151 = vld [vmem:[#allocation4 + $0x11c] sm:$0xf]
    %v152 = vld [vmem:[#allocation4 + $0x120] sm:$0xf]
    %v153 = vld [vmem:[#allocation4 + $0x124] sm:$0xf]
    %v154 = vld [vmem:[#allocation4 + $0x128] sm:$0xf]
    %v155 = vld [vmem:[#allocation4 + $0x12c] sm:$0xf]
    %v156 = vld [vmem:[#allocation4 + $0x130] sm:$0xf]
    %v157 = vld [vmem:[#allocation4 + $0x134] sm:$0xf]
    %v158 = vld [vmem:[#allocation4 + $0x138] sm:$0xf]
    %v159 = vld [vmem:[#allocation4 + $0x13c] sm:$0xf]
    %v160 = vld [vmem:[#allocation4 + $0x140] sm:$0xf]
    %v161 = vld [vmem:[#allocation4 + $0x144] sm:$0xf]
    %v162 = vld [vmem:[#allocation4 + $0x148] sm:$0xf]
    %v163 = vld [vmem:[#allocation4 + $0x14c] sm:$0xf]
    %v164 = vld [vmem:[#allocation4 + $0x150] sm:$0xf]
    %v165 = vld [vmem:[#allocation4 + $0x154] sm:$0xf]
    %v166 = vld [vmem:[#allocation4 + $0x158] sm:$0xf]
    %v167 = vld [vmem:[#allocation4 + $0x15c] sm:$0xf]
    %v168 = vld [vmem:[#allocation4 + $0x160] sm:$0xf]
    %v169 = vld [vmem:[#allocation4 + $0x164] sm:$0xf]
    %v170 = vld [vmem:[#allocation4 + $0x168] sm:$0xf]
    %v171 = vld [vmem:[#allocation4 + $0x16c] sm:$0xf]
    %v172 = vld [vmem:[#allocation4 + $0x170] sm:$0xf]
    %v173 = vld [vmem:[#allocation4 + $0x174] sm:$0xf]
    %v174 = vld [vmem:[#allocation4 + $0x178] sm:$0xf]
    %v175 = vld [vmem:[#allocation4 + $0x17c] sm:$0xf]
    %v176 = vld [vmem:[#allocation4 + $0x180] sm:$0xf]
    %v177 = vld [vmem:[#allocation4 + $0x184] sm:$0xf]
    %v178 = vld [vmem:[%s2] sm:$0x1]
    %v180 = vperm.slane %v178, 0
    %v280 = vunpack.c.l.b16 %v80
    %v281 = vunpack.c.l.b16 %v81
    %v282 = vunpack.c.l.b16 %v82
    %v283 = vunpack.c.l.b16 %v83
    %v284 = vunpack.c.l.b16 %v84
    %v285 = vunpack.c.l.b16 %v85
    %v286 = vunpack.c.l.b16 %v86
    %v287 = vunpack.c.l.b16 %v87
    %v288 = vunpack.c.l.b16 %v88
    %v289 = vunpack.c.l.b16 %v89
    %v290 = vunpack.c.l.b16 %v90
    %v291 = vunpack.c.l.b16 %v91
    %v292 = vunpack.c.l.b16 %v92
    %v293 = vunpack.c.l.b16 %v93
    %v294 = vunpack.c.l.b16 %v94
    %v295 = vunpack.c.l.b16 %v95
    %v296 = vunpack.c.l.b16 %v96
    %v297 = vunpack.c.l.b16 %v97
    %v298 = vunpack.c.l.b16 %v98
    %v299 = vunpack.c.l.b16 %v99
    %v300 = vunpack.c.l.b16 %v100
    %v301 = vunpack.c.l.b16 %v101
    %v302 = vunpack.c.l.b16 %v102
    %v303 = vunpack.c.l.b16 %v103
    %v304 = vunpack.c.l.b16 %v104
    %v305 = vunpack.c.l.b16 %v105
    %v306 = vunpack.c.l.b16 %v106
    %v307 = vunpack.c.l.b16 %v107
    %v308 = vunpack.c.l.b16 %v108
    %v309 = vunpack.c.l.b16 %v109
    %v310 = vunpack.c.l.b16 %v110
    %v311 = vunpack.c.l.b16 %v111
    %v312 = vunpack.c.l.b16 %v112
    %v313 = vunpack.c.l.b16 %v113
    %v314 = vunpack.c.l.b16 %v114
    %v315 = vunpack.c.l.b16 %v115
    %v316 = vunpack.c.l.b16 %v116
    %v317 = vunpack.c.l.b16 %v117
    %v318 = vunpack.c.l.b16 %v118
    %v319 = vunpack.c.l.b16 %v119
    %v320 = vunpack.c.l.b16 %v120
    %v321 = vunpack.c.l.b16 %v121
    %v322 = vunpack.c.l.b16 %v122
    %v323 = vunpack.c.l.b16 %v123
    %v324 = vunpack.c.l.b16 %v124
    %v325 = vunpack.c.l.b16 %v125
    %v326 = vunpack.c.l.b16 %v126
    %v327 = vunpack.c.l.b16 %v127
    %v328 = vunpack.c.l.b16 %v128
    %v329 = vunpack.c.l.b16 %v129
    %v330 = vunpack.c.l.b16 %v130
    %v331 = vunpack.c.l.b16 %v131
    %v332 = vunpack.c.l.b16 %v132
    %v333 = vunpack.c.l.b16 %v133
    %v334 = vunpack.c.l.b16 %v134
    %v335 = vunpack.c.l.b16 %v135
    %v336 = vunpack.c.l.b16 %v136
    %v337 = vunpack.c.l.b16 %v137
    %v338 = vunpack.c.l.b16 %v138
    %v339 = vunpack.c.l.b16 %v139
    %v340 = vunpack.c.l.b16 %v140
    %v341 = vunpack.c.l.b16 %v141
    %v342 = vunpack.c.l.b16 %v142
    %v343 = vunpack.c.l.b16 %v143
    %v344 = vunpack.c.l.b16 %v144
    %v345 = vunpack.c.l.b16 %v145
    %v346 = vunpack.c.l.b16 %v146
    %v347 = vunpack.c.l.b16 %v147
    %v348 = vunpack.c.l.b16 %v148
    %v349 = vunpack.c.l.b16 %v149
    %v350 = vunpack.c.l.b16 %v150
    %v351 = vunpack.c.l.b16 %v151
    %v352 = vunpack.c.l.b16 %v152
    %v353 = vunpack.c.l.b16 %v153
    %v354 = vunpack.c.l.b16 %v154
    %v355 = vunpack.c.l.b16 %v155
    %v356 = vunpack.c.l.b16 %v156
    %v357 = vunpack.c.l.b16 %v157
    %v358 = vunpack.c.l.b16 %v158
    %v359 = vunpack.c.l.b16 %v159
    %v360 = vunpack.c.l.b16 %v160
    %v361 = vunpack.c.l.b16 %v161
    %v362 = vunpack.c.l.b16 %v162
    %v363 = vunpack.c.l.b16 %v163
    %v364 = vunpack.c.l.b16 %v164
    %v365 = vunpack.c.l.b16 %v165
    %v366 = vunpack.c.l.b16 %v166
    %v367 = vunpack.c.l.b16 %v167
    %v368 = vunpack.c.l.b16 %v168
    %v369 = vunpack.c.l.b16 %v169
    %v370 = vunpack.c.l.b16 %v170
    %v371 = vunpack.c.l.b16 %v171
    %v372 = vunpack.c.l.b16 %v172
    %v373 = vunpack.c.l.b16 %v173
    %v374 = vunpack.c.l.b16 %v174
    %v375 = vunpack.c.l.b16 %v175
    %v376 = vunpack.c.l.b16 %v176
    %v377 = vunpack.c.l.b16 %v177
    %v378 = vpack.c.b16 %v281, %v280
    %v379 = vpack.c.b16 %v283, %v282
    %v380 = vpack.c.b16 %v285, %v284
    %v381 = vpack.c.b16 %v287, %v286
    %v382 = vpack.c.b16 %v289, %v288
    %v383 = vpack.c.b16 %v291, %v290
    %v384 = vpack.c.b16 %v293, %v292
    %v385 = vpack.c.b16 %v295, %v294
    %v386 = vpack.c.b16 %v297, %v296
    %v387 = vpack.c.b16 %v299, %v298
    %v388 = vpack.c.b16 %v301, %v300
    %v389 = vpack.c.b16 %v303, %v302
    %v390 = vpack.c.b16 %v305, %v304
    %v391 = vpack.c.b16 %v307, %v306
    %v392 = vpack.c.b16 %v309, %v308
    %v393 = vpack.c.b16 %v311, %v310
    %v394 = vpack.c.b16 %v313, %v312
    %v395 = vpack.c.b16 %v315, %v314
    %v396 = vpack.c.b16 %v317, %v316
    %v397 = vpack.c.b16 %v319, %v318
    %v398 = vpack.c.b16 %v321, %v320
    %v399 = vpack.c.b16 %v323, %v322
    %v400 = vpack.c.b16 %v325, %v324
    %v401 = vpack.c.b16 %v327, %v326
    %v402 = vpack.c.b16 %v329, %v328
    %v403 = vpack.c.b16 %v331, %v330
    %v404 = vpack.c.b16 %v333, %v332
    %v405 = vpack.c.b16 %v335, %v334
    %v406 = vpack.c.b16 %v337, %v336
    %v407 = vpack.c.b16 %v339, %v338
    %v408 = vpack.c.b16 %v341, %v340
    %v409 = vpack.c.b16 %v343, %v342
    %v410 = vpack.c.b16 %v345, %v344
    %v411 = vpack.c.b16 %v347, %v346
    %v412 = vpack.c.b16 %v349, %v348
    %v413 = vpack.c.b16 %v351, %v350
    %v414 = vpack.c.b16 %v353, %v352
    %v415 = vpack.c.b16 %v355, %v354
    %v416 = vpack.c.b16 %v357, %v356
    %v417 = vpack.c.b16 %v359, %v358
    %v418 = vpack.c.b16 %v361, %v360
    %v419 = vpack.c.b16 %v363, %v362
    %v420 = vpack.c.b16 %v365, %v364
    %v421 = vpack.c.b16 %v367, %v366
    %v422 = vpack.c.b16 %v369, %v368
    %v423 = vpack.c.b16 %v371, %v370
    %v424 = vpack.c.b16 %v373, %v372
    %v425 = vpack.c.b16 %v375, %v374
    %v426 = vpack.c.b16 %v377, %v376
    %vm476 = vcmask 130048
    %v478 = vsel %vm476, %v79, 0
    %480 = vmatpush.bf16.msra.mxu0 %v385
    %481 = vmatpush.bf16.msra.mxu0 %v384
    %482 = vmatpush.bf16.msra.mxu0 %v383
    %483 = vmatpush.bf16.msra.mxu0 %v382
    %484 = vmatpush.bf16.msra.mxu0 %v381
    %485 = vmatpush.bf16.msra.mxu0 %v380
    %486 = vmatpush.bf16.msra.mxu0 %v379
    %487 = vmatpush.bf16.msra.mxu0 %v378
    %488 = vmatmul.bf16.gmra.mxu0 %v73
    %v489 = vpop.f32.mrf.mxu0
    %v490 = vadd.f32 %v180, %v489
    %v491 = vpop.f32.mrf.mxu0
    %492 = vdwg.mxu0
    %493 = vmatpush.bf16.msra.mxu0 %v393
    %494 = vmatpush.bf16.msra.mxu0 %v392
    %495 = vmatpush.bf16.msra.mxu0 %v391
    %496 = vmatpush.bf16.msra.mxu0 %v390
    %497 = vmatpush.bf16.msra.mxu0 %v389
    %498 = vmatpush.bf16.msra.mxu0 %v388
    %499 = vmatpush.bf16.msra.mxu0 %v387
    %500 = vmatpush.bf16.msra.mxu0 %v386
    %501 = vmatmul.bf16.gmra.mxu0 %v74
    %v502 = vpop.f32.mrf.mxu0
    %v503 = vadd.f32 %v490, %v502
    %v504 = vpop.f32.mrf.mxu0
    %505 = vdwg.mxu0
    %506 = vmatpush.bf16.msra.mxu0 %v401
    %507 = vmatpush.bf16.msra.mxu0 %v400
    %508 = vmatpush.bf16.msra.mxu0 %v399
    %509 = vmatpush.bf16.msra.mxu0 %v398
    %510 = vmatpush.bf16.msra.mxu0 %v397
    %511 = vmatpush.bf16.msra.mxu0 %v396
    %512 = vmatpush.bf16.msra.mxu0 %v395
    %513 = vmatpush.bf16.msra.mxu0 %v394
    %514 = vmatmul.bf16.gmra.mxu0 %v75
    %v515 = vpop.f32.mrf.mxu0
    %v516 = vadd.f32 %v503, %v515
    %v517 = vpop.f32.mrf.mxu0
    %518 = vdwg.mxu0
    %519 = vmatpush.bf16.msra.mxu0 %v409
    %520 = vmatpush.bf16.msra.mxu0 %v408
    %521 = vmatpush.bf16.msra.mxu0 %v407
    %522 = vmatpush.bf16.msra.mxu0 %v406
    %523 = vmatpush.bf16.msra.mxu0 %v405
    %524 = vmatpush.bf16.msra.mxu0 %v404
    %525 = vmatpush.bf16.msra.mxu0 %v403
    %526 = vmatpush.bf16.msra.mxu0 %v402
    %527 = vmatmul.bf16.gmra.mxu0 %v76
    %v528 = vpop.f32.mrf.mxu0
    %v529 = vadd.f32 %v516, %v528
    %v530 = vpop.f32.mrf.mxu0
    %531 = vdwg.mxu0
    %532 = vmatpush.bf16.msra.mxu0 %v417
    %533 = vmatpush.bf16.msra.mxu0 %v416
    %534 = vmatpush.bf16.msra.mxu0 %v415
    %535 = vmatpush.bf16.msra.mxu0 %v414
    %536 = vmatpush.bf16.msra.mxu0 %v413
    %537 = vmatpush.bf16.msra.mxu0 %v412
    %538 = vmatpush.bf16.msra.mxu0 %v411
    %539 = vmatpush.bf16.msra.mxu0 %v410
    %540 = vmatmul.bf16.gmra.mxu0 %v77
    %v541 = vpop.f32.mrf.mxu0
    %v542 = vadd.f32 %v529, %v541
    %v543 = vpop.f32.mrf.mxu0
    %544 = vdwg.mxu0
    %545 = vmatpush.bf16.msra.mxu0 %v425
    %546 = vmatpush.bf16.msra.mxu0 %v424
    %547 = vmatpush.bf16.msra.mxu0 %v423
    %548 = vmatpush.bf16.msra.mxu0 %v422
    %549 = vmatpush.bf16.msra.mxu0 %v421
    %550 = vmatpush.bf16.msra.mxu0 %v420
    %551 = vmatpush.bf16.msra.mxu0 %v419
    %552 = vmatpush.bf16.msra.mxu0 %v418
    %553 = vmatmul.bf16.gmra.mxu0 %v78
    %v554 = vpop.f32.mrf.mxu0
    %v555 = vadd.f32 %v542, %v554
    %v556 = vpop.f32.mrf.mxu0
    %557 = vdwg.mxu0
    %558 = vmatpush.bf16.msra.mxu0 0
    %559 = vmatpush.bf16.msra.mxu0 0
    %560 = vmatpush.bf16.msra.mxu0 0
    %561 = vmatpush.bf16.msra.mxu0 0
    %562 = vmatpush.bf16.msra.mxu0 0
    %563 = vmatpush.bf16.msra.mxu0 0
    %564 = vmatpush.bf16.msra.mxu0 0
    %565 = vmatpush.bf16.msra.mxu0 %v426
    %566 = vmatmul.bf16.gmra.mxu0 %v478
    %v567 = vpop.f32.mrf.mxu0
    %v568 = vadd.f32 %v555, %v567
    %v569 = vpop.f32.mrf.mxu0
    %570 = vdwg.mxu0
    %v571 = vmax.f32 %v568, 0.0
    %v572 = vpack.c.bf16 %v571, %v571
    %v573 = vld [vmem:[#allocation6] sm:$0xf]
    %v574 = vld [vmem:[#allocation6 + $0x4] sm:$0xf]
    %v575 = vld [vmem:[#allocation6 + $0x8] sm:$0xf]
    %v576 = vld [vmem:[#allocation6 + $0xc] sm:$0xf]
    %v577 = vld [vmem:[#allocation6 + $0x10] sm:$0xf]
    %v578 = vld [vmem:[#allocation6 + $0x14] sm:$0xf]
    %v579 = vld [vmem:[#allocation6 + $0x18] sm:$0xf]
    %v580 = vld [vmem:[#allocation6 + $0x1c] sm:$0xf]
    %v581 = vld [vmem:[#allocation6 + $0x20] sm:$0xf]
    %v582 = vld [vmem:[#allocation6 + $0x24] sm:$0xf]
    %v583 = vld [vmem:[#allocation6 + $0x28] sm:$0xf]
    %v584 = vld [vmem:[#allocation6 + $0x2c] sm:$0xf]
    %v585 = vld [vmem:[#allocation6 + $0x30] sm:$0xf]
    %v586 = vld [vmem:[#allocation6 + $0x34] sm:$0xf]
    %v587 = vld [vmem:[#allocation6 + $0x38] sm:$0xf]
    %v588 = vld [vmem:[#allocation6 + $0x3c] sm:$0xf]
    %v589 = vld [vmem:[%s4] sm:$0x1]
    %v591 = vperm.slane %v589, 0
    %v609 = vunpack.c.l.b16 %v573
    %v610 = vunpack.c.l.b16 %v574
    %v611 = vunpack.c.l.b16 %v575
    %v612 = vunpack.c.l.b16 %v576
    %v613 = vunpack.c.l.b16 %v577
    %v614 = vunpack.c.l.b16 %v578
    %v615 = vunpack.c.l.b16 %v579
    %v616 = vunpack.c.l.b16 %v580
    %v617 = vunpack.c.l.b16 %v581
    %v618 = vunpack.c.l.b16 %v582
    %v619 = vunpack.c.l.b16 %v583
    %v620 = vunpack.c.l.b16 %v584
    %v621 = vunpack.c.l.b16 %v585
    %v622 = vunpack.c.l.b16 %v586
    %v623 = vunpack.c.l.b16 %v587
    %v624 = vunpack.c.l.b16 %v588
    %v625 = vpack.c.b16 %v610, %v609
    %v626 = vpack.c.b16 %v612, %v611
    %v627 = vpack.c.b16 %v614, %v613
    %v628 = vpack.c.b16 %v616, %v615
    %v629 = vpack.c.b16 %v618, %v617
    %v630 = vpack.c.b16 %v620, %v619
    %v631 = vpack.c.b16 %v622, %v621
    %v632 = vpack.c.b16 %v624, %v623
    %641 = vmatpush.bf16.msra.mxu0 %v632
    %642 = vmatpush.bf16.msra.mxu0 %v631
    %643 = vmatpush.bf16.msra.mxu0 %v630
    %644 = vmatpush.bf16.msra.mxu0 %v629
    %645 = vmatpush.bf16.msra.mxu0 %v628
    %646 = vmatpush.bf16.msra.mxu0 %v627
    %647 = vmatpush.bf16.msra.mxu0 %v626
    %648 = vmatpush.bf16.msra.mxu0 %v625
    %649 = vmatmul.bf16.gmra.mxu0 %v572
    %v650 = vpop.f32.mrf.mxu0
    %v651 = vadd.f32 %v591, %v650
    %v652 = vpop.f32.mrf.mxu0
    %653 = vdwg.mxu0
    %v654 = vpack.c.bf16 %v651, %v651
    %655 = vst [vmem:[%s5] sm:$0xf] %v654
    // Predicated region
    $region34: #{simple_nn_forward.1} parent=1 // pred_check
      _
    $region35: #{simple_nn_forward.1} parent=1 // pred_check_branch
      %657 = sbr.rel (0) target = $region37
    $region36: #{simple_nn_forward.1} parent=1 // pred_region
      _
    $region37: #{simple_nn_forward.1} parent=1 // pred_fallthru
      _
    // Predicated region
    $region38: #{simple_nn_forward.1} parent=1 // pred_check
      _
    $region39: #{simple_nn_forward.1} parent=1 // pred_check_branch
      %659 = sbr.rel (0) target = $region41
    $region40: #{simple_nn_forward.1} parent=1 // pred_region
      _
    $region41: #{simple_nn_forward.1} parent=1 // pred_fallthru
      _
    %660 = vsyncpa [#allocation3], 1
    %661 = vsyncpa [#allocation5], 1

</llo_original>
